<compile_context>
chip_gen: v5e
topology: v5e:2x2
jax: 0.10.0
libtpu: 0.0.40
codegen_flags: <defaults>
</compile_context>

<pallas_src>
import functools

import jax
import jax.numpy as jnp
from jax.experimental import pallas as pl
from jax.experimental.pallas import tpu as pltpu


def _round_up(x: int, m: int) -> int:
    return ((x + m - 1) // m) * m


def decoder_kernel(z_ref, w1_ref, b1_ref, w2_ref, b2_ref, out_ref):
    # fc1: z @ W1 + b1, ReLU  (MXU matmul with f32 accumulation; VPU bias/ReLU)
    h = jnp.dot(z_ref[...], w1_ref[...], preferred_element_type=jnp.float32)
    h = jnp.maximum(h + b1_ref[...], 0.0)
    # out: h @ W2 + b2   (h stays in VMEM/vregs — never written to HBM)
    o = jnp.dot(h, w2_ref[...], preferred_element_type=jnp.float32)
    out_ref[...] = (o + b2_ref[...]).astype(out_ref.dtype)


@functools.partial(jax.jit, static_argnames=("tm",))
def decoder_forward(z, w1, b1, w2, b2, *, tm=512):
    """Fused decoder forward.

    z  : (B, z_dim)          float32
    w1 : (z_dim, h_dim)      float32   (already transposed vs. PyTorch (out,in))
    b1 : (1, h_dim)          float32
    w2 : (h_dim, input_dim)  float32
    b2 : (1, input_dim)      float32
    returns (B, input_dim)   float32
    """
    B, z_dim = z.shape
    h_dim = w1.shape[1]
    input_dim = w2.shape[1]

    # Batch tile: big (512, 8-aligned) for large batches to amortize per-step
    # overhead; the whole batch in one tile when it already fits (a block dim
    # equal to the full array dim is always legal).  Non-divisible grids are
    # handled by Pallas (partial last block), so no batch padding is needed.
    if B <= tm:
        TM = B
    else:
        TM = tm  # tm is 8-aligned by default (512)
        assert TM % 8 == 0
    num_tiles = pl.cdiv(B, TM)

    flops = 2 * B * (z_dim * h_dim + h_dim * input_dim)
    bytes_accessed = 4 * (
        B * z_dim + z_dim * h_dim + h_dim + h_dim * input_dim + input_dim
        + B * input_dim
    )

    return pl.pallas_call(
        decoder_kernel,
        out_shape=jax.ShapeDtypeStruct((B, input_dim), z.dtype),
        grid=(num_tiles,),
        in_specs=[
            pl.BlockSpec((TM, z_dim), lambda i: (i, 0)),        # batch-tiled z
            pl.BlockSpec((z_dim, h_dim), lambda i: (0, 0)),     # VMEM-resident W1
            pl.BlockSpec((1, h_dim), lambda i: (0, 0)),         # b1
            pl.BlockSpec((h_dim, input_dim), lambda i: (0, 0)), # VMEM-resident W2
            pl.BlockSpec((1, input_dim), lambda i: (0, 0)),     # b2
        ],
        out_specs=pl.BlockSpec((TM, input_dim), lambda i: (i, 0)),
        compiler_params=pltpu.CompilerParams(
            dimension_semantics=("parallel",),
        ),
        cost_estimate=pl.CostEstimate(
            flops=flops, transcendentals=0, bytes_accessed=bytes_accessed
        ),
    )(z, w1, b1, w2, b2)


def init_decoder_params(key, input_dim, z_dim, h_dim, dtype=jnp.float32):
    """Deterministic init mirroring nn.Linear's uniform(-1/sqrt(fan_in), +).

    Weights are stored pre-transposed to (in, out) once here so the hot path
    does no per-call layout work.
    """
    k1, k2, k3, k4 = jax.random.split(key, 4)
    lim1 = 1.0 / jnp.sqrt(z_dim)
    lim2 = 1.0 / jnp.sqrt(h_dim)
    w1 = jax.random.uniform(k1, (z_dim, h_dim), dtype, -lim1, lim1)
    b1 = jax.random.uniform(k2, (1, h_dim), dtype, -lim1, lim1)
    w2 = jax.random.uniform(k3, (h_dim, input_dim), dtype, -lim2, lim2)
    b2 = jax.random.uniform(k4, (1, input_dim), dtype, -lim2, lim2)
    return w1, b1, w2, b2


if __name__ == "__main__":
    # Small shapes consistent with the module's forward.
    B, z_dim, h_dim, input_dim = 8, 16, 32, 64

    key = jax.random.PRNGKey(0)
    kz, kp = jax.random.split(key)
    z = jax.random.normal(kz, (B, z_dim), dtype=jnp.float32)
    w1, b1, w2, b2 = init_decoder_params(kp, input_dim, z_dim, h_dim)

    recon = decoder_forward(z, w1, b1, w2, b2)
    recon = jax.block_until_ready(recon)

    # Pure-JAX reference check.
    ref = jnp.maximum(z @ w1 + b1, 0.0) @ w2 + b2
    assert recon.shape == (B, input_dim)
    assert jnp.allclose(recon, ref, atol=1e-5, rtol=1e-5)

    # Exercise the multi-tile, non-divisible (B % TM != 0) grid path.
    B2 = 600
    z2 = jax.random.normal(jax.random.PRNGKey(1), (B2, z_dim), dtype=jnp.float32)
    recon2 = jax.block_until_ready(decoder_forward(z2, w1, b1, w2, b2))
    ref2 = jnp.maximum(z2 @ w1 + b1, 0.0) @ w2 + b2
    assert recon2.shape == (B2, input_dim)
    assert jnp.allclose(recon2, ref2, atol=1e-4, rtol=1e-4)

    print("KERNEL_OK")
</pallas_src>

<mosaic_0001>
module attributes {stable_mosaic.version = 11 : i64} {
  func.func @decoder_kernel(%arg0: i32, %arg1: memref<8x16xf32, #tpu.memory_space<vmem>>, %arg2: memref<16x32xf32, #tpu.memory_space<vmem>>, %arg3: memref<1x32xf32, #tpu.memory_space<vmem>>, %arg4: memref<32x64xf32, #tpu.memory_space<vmem>>, %arg5: memref<1x64xf32, #tpu.memory_space<vmem>>, %arg6: memref<8x64xf32, #tpu.memory_space<vmem>>) attributes {dimension_semantics = [#tpu.dimension_semantics<parallel>], iteration_bounds = array<i64: 1>, scalar_prefetch = 0 : i64, scratch_operands = 0 : i64, tpu.core_type = #tpu.core_type<tc>, window_params = [{transform_indices = @transform_0, window_bounds = array<i64: 8, 16>}, {pipeline_mode = #tpu.pipeline_mode<synchronous>, transform_indices = @transform_1, window_bounds = array<i64: 16, 32>}, {pipeline_mode = #tpu.pipeline_mode<synchronous>, transform_indices = @transform_2, window_bounds = array<i64: 1, 32>}, {pipeline_mode = #tpu.pipeline_mode<synchronous>, transform_indices = @transform_3, window_bounds = array<i64: 32, 64>}, {pipeline_mode = #tpu.pipeline_mode<synchronous>, transform_indices = @transform_4, window_bounds = array<i64: 1, 64>}, {transform_indices = @transform_5, window_bounds = array<i64: 8, 64>}]} {
    %c0 = arith.constant 0 : index
    %c0_0 = arith.constant 0 : index
    %0 = vector.load %arg1[%c0, %c0_0] : memref<8x16xf32, #tpu.memory_space<vmem>>, vector<8x16xf32>
    %c0_1 = arith.constant 0 : index
    %c0_2 = arith.constant 0 : index
    %1 = vector.load %arg2[%c0_1, %c0_2] : memref<16x32xf32, #tpu.memory_space<vmem>>, vector<16x32xf32>
    %cst = arith.constant dense<0.000000e+00> : vector<8x32xf32>
    %2 = tpu.matmul %0, %1, %cst {dimension_numbers = #tpu.dot_dimension_numbers<[1], [0], [0], [1], [0, 0, 1, 1], [], []>} : vector<8x16xf32>, vector<16x32xf32>, vector<8x32xf32> -> vector<8x32xf32>
    %c0_3 = arith.constant 0 : index
    %c0_4 = arith.constant 0 : index
    %3 = vector.load %arg3[%c0_3, %c0_4] : memref<1x32xf32, #tpu.memory_space<vmem>>, vector<1x32xf32>
    %4 = vector.broadcast %3 : vector<1x32xf32> to vector<8x32xf32>
    %5 = arith.addf %2, %4 : vector<8x32xf32>
    %cst_5 = arith.constant 0.000000e+00 : f32
    %6 = vector.broadcast %cst_5 : f32 to vector<8x32xf32>
    %7 = arith.maximumf %5, %6 : vector<8x32xf32>
    %c0_6 = arith.constant 0 : index
    %c0_7 = arith.constant 0 : index
    %8 = vector.load %arg4[%c0_6, %c0_7] : memref<32x64xf32, #tpu.memory_space<vmem>>, vector<32x64xf32>
    %cst_8 = arith.constant dense<0.000000e+00> : vector<8x64xf32>
    %9 = tpu.matmul %7, %8, %cst_8 {dimension_numbers = #tpu.dot_dimension_numbers<[1], [0], [0], [1], [0, 0, 1, 1], [], []>} : vector<8x32xf32>, vector<32x64xf32>, vector<8x64xf32> -> vector<8x64xf32>
    %c0_9 = arith.constant 0 : index
    %c0_10 = arith.constant 0 : index
    %10 = vector.load %arg5[%c0_9, %c0_10] : memref<1x64xf32, #tpu.memory_space<vmem>>, vector<1x64xf32>
    %11 = vector.broadcast %10 : vector<1x64xf32> to vector<8x64xf32>
    %12 = arith.addf %9, %11 : vector<8x64xf32>
    %c0_11 = arith.constant 0 : index
    %c0_12 = arith.constant 0 : index
    %13 = vector.load %arg6[%c0_11, %c0_12] : memref<8x64xf32, #tpu.memory_space<vmem>>, vector<8x64xf32>
    tpu.vector_store %arg6[%c0_11, %c0_12], %12 {strides = array<i32>} : memref<8x64xf32, #tpu.memory_space<vmem>>, vector<8x64xf32>,
    return
  }
  func.func @transform_0(%arg0: i32) -> (i32, i32) {
    %c0_i32 = arith.constant 0 : i32
    %c0_i32_0 = arith.constant 0 : i32
    return %arg0, %c0_i32 : i32, i32
  }
  func.func @transform_1(%arg0: i32) -> (i32, i32) {
    %c0_i32 = arith.constant 0 : i32
    %c0_i32_0 = arith.constant 0 : i32
    %c0_i32_1 = arith.constant 0 : i32
    return %c0_i32, %c0_i32_0 : i32, i32
  }
  func.func @transform_2(%arg0: i32) -> (i32, i32) {
    %c0_i32 = arith.constant 0 : i32
    %c0_i32_0 = arith.constant 0 : i32
    %c0_i32_1 = arith.constant 0 : i32
    return %c0_i32, %c0_i32_0 : i32, i32
  }
  func.func @transform_3(%arg0: i32) -> (i32, i32) {
    %c0_i32 = arith.constant 0 : i32
    %c0_i32_0 = arith.constant 0 : i32
    %c0_i32_1 = arith.constant 0 : i32
    return %c0_i32, %c0_i32_0 : i32, i32
  }
  func.func @transform_4(%arg0: i32) -> (i32, i32) {
    %c0_i32 = arith.constant 0 : i32
    %c0_i32_0 = arith.constant 0 : i32
    %c0_i32_1 = arith.constant 0 : i32
    return %c0_i32, %c0_i32_0 : i32, i32
  }
  func.func @transform_5(%arg0: i32) -> (i32, i32) {
    %c0_i32 = arith.constant 0 : i32
    %c0_i32_0 = arith.constant 0 : i32
    return %arg0, %c0_i32 : i32, i32
  }
}

</mosaic_0001>

<llo_original>
// kernel: decoder_forward.1
$region0: #{decoder_forward.1}
  #allocation0 [shape = 'u32[]', space=smem, size = 0x4, offset = 0x4, fixed_abs, tag = 'smem constant byte address 0x4 - core index']
  #allocation1 [shape = 'u32[72,128]{1,0:T(1,128)}', space=vmem, size = 0x9000, scoped, tag = 'internal scratch']
  %s0 = inlined_call_operand.hbm [shape: f32[8,16], index: 0, kind: input, shape index: {}]
  %s1 = inlined_call_operand.hbm [shape: f32[16,32], index: 1, kind: input, shape index: {}]
  %s2 = inlined_call_operand.vmem [shape: f32[1,32], index: 2, kind: input, shape index: {}]
  %s3 = inlined_call_operand.hbm [shape: f32[32,64], index: 3, kind: input, shape index: {}]
  %s4 = inlined_call_operand.vmem [shape: f32[1,64], index: 4, kind: input, shape index: {}]
  %s5 = inlined_call_operand.hbm [shape: f32[8,64], index: 5, kind: output, shape index: {}]
  %s6 = sld [smem:[#allocation0]]
  $region42: #{decoder_forward.1} parent=0
    _
  %s8 = ssub.s32 1, %s6
  %s9 = scalar_select 0, %s8, %s6
  $region1: #{decoder_forward.1} parent=0
    #allocation2 [shape = 'u8[4096]{0}', space=vmem, size = 0x1000, scoped, tag = 'input window, operand 0, single buffered']
    #allocation3 [shape = 's32[1]{0}', space=sflag, size = 0x4, scoped, tag = 'scoped memory for decoder_forward.1']
    #allocation4 [shape = 's32[1]{0}', space=sflag, size = 0x4, scoped, tag = 'scoped memory for decoder_forward.1']
    #allocation5 [shape = 'u8[8192]{0}', space=vmem, size = 0x2000, scoped, tag = 'input window, operand 1, single buffered']
    #allocation6 [shape = 's32[1]{0}', space=sflag, size = 0x4, scoped, tag = 'scoped memory for decoder_forward.1']
    #allocation7 [shape = 'u8[16384]{0}', space=vmem, size = 0x4000, scoped, tag = 'input window, operand 3, single buffered']
    #allocation8 [shape = 'u8[4096]{0}', space=vmem, size = 0x1000, scoped, tag = 'output window, operand 0, single buffered']
    %10 = vsyncpa [#allocation3], 0
    %11 = vsyncpa [#allocation6], 0
    %12 = vsyncpa [#allocation4], 0
    // Predicated region
    $region2: #{decoder_forward.1} parent=1 // pred_check
      _
    $region3: #{decoder_forward.1} parent=1 // pred_check_branch
      %14 = sbr.rel (0) target = $region5
    $region4: #{decoder_forward.1} parent=1 // pred_region
      %16 = vsyncadd [#allocation3], 0
      %s18 = sshll.u32 %s0, 4
      %s19 = int_to_ptr.hbm [resolvable:$true] %s18
      %s20 = sshll.u32 [#allocation2], 4
      %s21 = int_to_ptr.vmem [resolvable:$true] %s20
      %23 = dma.hbm_to_vmem [thread:$0]  %s19, 128, %s21, [#allocation3]
    $region5: #{decoder_forward.1} parent=1 // pred_fallthru
      _
    // Predicated region
    $region6: #{decoder_forward.1} parent=1 // pred_check
      _
    $region7: #{decoder_forward.1} parent=1 // pred_check_branch
      %25 = sbr.rel (0) target = $region9
    $region8: #{decoder_forward.1} parent=1 // pred_region
      %27 = vsyncadd [#allocation6], 0
      %s28 = sshll.u32 %s1, 4
      %s29 = int_to_ptr.hbm [resolvable:$true] %s28
      %s30 = sshll.u32 [#allocation5], 4
      %s31 = int_to_ptr.vmem [resolvable:$true] %s30
      %36 = dma.hbm_to_vmem [thread:$0]  %s29, 256, %s31, [#allocation6], 128, 128, 8
    $region9: #{decoder_forward.1} parent=1 // pred_fallthru
      _
    // Predicated region
    $region10: #{decoder_forward.1} parent=1 // pred_check
      _
    $region11: #{decoder_forward.1} parent=1 // pred_check_branch
      %38 = sbr.rel (0) target = $region13
    $region12: #{decoder_forward.1} parent=1 // pred_region
      _
    $region13: #{decoder_forward.1} parent=1 // pred_fallthru
      _
    // Predicated region
    $region14: #{decoder_forward.1} parent=1 // pred_check
      _
    $region15: #{decoder_forward.1} parent=1 // pred_check_branch
      %40 = sbr.rel (0) target = $region17
    $region16: #{decoder_forward.1} parent=1 // pred_region
      %42 = vsyncadd [#allocation6], 0
      %s43 = sshll.u32 %s3, 4
      %s44 = int_to_ptr.hbm [resolvable:$true] %s43
      %s45 = sshll.u32 [#allocation7], 4
      %s46 = int_to_ptr.vmem [resolvable:$true] %s45
      %51 = dma.hbm_to_vmem [thread:$0]  %s44, 512, %s46, [#allocation6], 128, 128, 8
    $region17: #{decoder_forward.1} parent=1 // pred_fallthru
      _
    // Predicated region
    $region18: #{decoder_forward.1} parent=1 // pred_check
      _
    $region19: #{decoder_forward.1} parent=1 // pred_check_branch
      %53 = sbr.rel (0) target = $region21
    $region20: #{decoder_forward.1} parent=1 // pred_region
      _
    $region21: #{decoder_forward.1} parent=1 // pred_fallthru
      _
    // Predicated region
    $region22: #{decoder_forward.1} parent=1 // pred_check
      _
    $region23: #{decoder_forward.1} parent=1 // pred_check_branch
      %55 = sbr.rel (0) target = $region25
    $region24: #{decoder_forward.1} parent=1 // pred_region
      %57 = dma.done [#allocation3], 128
    $region25: #{decoder_forward.1} parent=1 // pred_fallthru
      _
    // Predicated region
    $region26: #{decoder_forward.1} parent=1 // pred_check
      _
    $region27: #{decoder_forward.1} parent=1 // pred_check_branch
      %59 = sbr.rel (0) target = $region29
    $region28: #{decoder_forward.1} parent=1 // pred_region
      %61 = dma.done [#allocation6], 256
    $region29: #{decoder_forward.1} parent=1 // pred_fallthru
      _
    // Predicated region
    $region30: #{decoder_forward.1} parent=1 // pred_check
      _
    $region31: #{decoder_forward.1} parent=1 // pred_check_branch
      %63 = sbr.rel (0) target = $region33
    $region32: #{decoder_forward.1} parent=1 // pred_region
      %65 = dma.done [#allocation6], 512
    $region33: #{decoder_forward.1} parent=1 // pred_fallthru
      _
    %v66 = vld [vmem:[#allocation2] sm:$0xff]
    %v67 = vld [vmem:[#allocation5] sm:$0xff]
    %v68 = vld [vmem:[#allocation5 + $0x8] sm:$0xff]
    %v69 = vld [vmem:[%s2] sm:$0x1]
    %v71 = vperm.slane %v69, 0
    %vm73 = vcmask 130048
    %v75 = vsel %vm73, %v66, 0
    %77 = vmatpush.msra.mxu0 0.0
    %78 = vmatpush.msra.mxu0 0.0
    %79 = vmatpush.msra.mxu0 0.0
    %80 = vmatpush.msra.mxu0 0.0
    %81 = vmatpush.msra.mxu0 0.0
    %82 = vmatpush.msra.mxu0 0.0
    %83 = vmatpush.msra.mxu0 0.0
    %84 = vmatpush.msra.mxu0 0.0
    %85 = vmatpush.msra.mxu0 0.0
    %86 = vmatpush.msra.mxu0 0.0
    %87 = vmatpush.msra.mxu0 0.0
    %88 = vmatpush.msra.mxu0 0.0
    %89 = vmatpush.msra.mxu0 0.0
    %90 = vmatpush.msra.mxu0 0.0
    %91 = vmatpush.msra.mxu0 %v68
    %92 = vmatpush.msra.mxu0 %v67
    %93 = vmatmul.f32.gmra.mxu0 %v75
    %v94 = vpop.f32.mrf.mxu0
    %v95 = vadd.f32 %v71, %v94
    %96 = vdwg.mxu0
    %v97 = vmax.f32 %v95, 0.0
    %v98 = vld [vmem:[#allocation7] sm:$0xff]
    %v99 = vld [vmem:[#allocation7 + $0x8] sm:$0xff]
    %v100 = vld [vmem:[#allocation7 + $0x10] sm:$0xff]
    %v101 = vld [vmem:[#allocation7 + $0x18] sm:$0xff]
    %v102 = vld [vmem:[%s4] sm:$0x1]
    %v104 = vperm.slane %v102, 0
    %vm106 = vcmask 261120
    %v108 = vsel %vm106, %v97, 0
    %110 = vmatpush.msra.mxu0 0.0
    %111 = vmatpush.msra.mxu0 0.0
    %112 = vmatpush.msra.mxu0 0.0
    %113 = vmatpush.msra.mxu0 0.0
    %114 = vmatpush.msra.mxu0 0.0
    %115 = vmatpush.msra.mxu0 0.0
    %116 = vmatpush.msra.mxu0 0.0
    %117 = vmatpush.msra.mxu0 0.0
    %118 = vmatpush.msra.mxu0 0.0
    %119 = vmatpush.msra.mxu0 0.0
    %120 = vmatpush.msra.mxu0 0.0
    %121 = vmatpush.msra.mxu0 0.0
    %122 = vmatpush.msra.mxu0 %v101
    %123 = vmatpush.msra.mxu0 %v100
    %124 = vmatpush.msra.mxu0 %v99
    %125 = vmatpush.msra.mxu0 %v98
    %126 = vmatmul.f32.gmra.mxu0 %v108
    %v127 = vpop.f32.mrf.mxu0
    %v128 = vadd.f32 %v104, %v127
    %129 = vdwg.mxu0
    %vm130 = vcmask 523264
    %131 = vst.msk [vmem:[#allocation8] sm:$0xff] %vm130, %v128
    // Predicated region
    $region34: #{decoder_forward.1} parent=1 // pred_check
      _
    $region35: #{decoder_forward.1} parent=1 // pred_check_branch
      %133 = sbr.rel (0) target = $region37
    $region36: #{decoder_forward.1} parent=1 // pred_region
      %135 = vsyncadd [#allocation4], 0
      %s137 = sshll.u32 [#allocation8], 4
      %s138 = int_to_ptr.vmem [resolvable:$true] %s137
      %s139 = sshll.u32 %s5, 4
      %s140 = int_to_ptr.hbm [resolvable:$true] %s139
      %142 = dma.vmem_to_hbm [thread:$0]  %s138, 128, %s140, [#allocation4]
    $region37: #{decoder_forward.1} parent=1 // pred_fallthru
      _
    // Predicated region
    $region38: #{decoder_forward.1} parent=1 // pred_check
      _
    $region39: #{decoder_forward.1} parent=1 // pred_check_branch
      %144 = sbr.rel (0) target = $region41
    $region40: #{decoder_forward.1} parent=1 // pred_region
      %146 = dma.done [#allocation4], 128
    $region41: #{decoder_forward.1} parent=1 // pred_fallthru
      _
    %147 = vsyncpa [#allocation3], 1
    %148 = vsyncpa [#allocation6], 1
    %149 = vsyncpa [#allocation4], 1

</llo_original>
